<compile_context>
chip_gen: v6e
topology: v6e:2x2x1
jax: 0.10.0
libtpu: 0.0.40
codegen_flags: <defaults>
</compile_context>

<pallas_src>
from functools import lru_cache

import numpy as np
import jax
import jax.numpy as jnp
from jax.experimental import pallas as pl
from jax.experimental.pallas import tpu as pltpu


def _round_up(x, m):
    return ((x + m - 1) // m) * m


@lru_cache(maxsize=16)
def _dft_constants_np(L):
    """Hermitian real-DFT matrices (host/numpy, cached per L).

    Returns:
      fwd: (2*Fp, L)  rows [cos; sin] of the forward real DFT (zero rows for padding).
      inv: (L, 2*Fp)  columns [(w/L)*cos | -(w/L)*sin] of the inverse real DFT with the
                      Hermitian weights w = {1, 2, ..., 2, (1 at Nyquist if L even)}.
    """
    F = L // 2 + 1
    Fp = _round_up(F, 8)                      # sublane-aligned frequency count
    f = np.arange(Fp, dtype=np.int64)
    s = np.arange(L, dtype=np.int64)

    # Exact angles via modular index product (avoids large-argument trig error).
    ang_fs = (2.0 * np.pi / L) * np.mod(np.outer(f, s), L).astype(np.float64)
    valid = (f < F).astype(np.float64)[:, None]
    fwd = np.concatenate([np.cos(ang_fs) * valid, np.sin(ang_fs) * valid], axis=0)

    w = np.full((Fp,), 2.0, dtype=np.float64)
    w[0] = 1.0
    if L % 2 == 0:
        w[F - 1] = 1.0
    w[F:] = 0.0
    w /= L

    ang_nf = (2.0 * np.pi / L) * np.mod(np.outer(s, f), L).astype(np.float64)
    inv = np.concatenate([np.cos(ang_nf) * w[None, :], -np.sin(ang_nf) * w[None, :]],
                         axis=1)
    return fwd.astype(np.float32), inv.astype(np.float32)


def _pick_tiling(c_total, max_ct):
    """Channel-tile width (multiple of 128 lanes) and padded channel count.

    Pads up to a multiple of the chosen tile width (no divisibility games) and keeps
    the grid >= 2 steps whenever there is more than one 128-lane group (v7x: 2 TCs).
    """
    c128 = _round_up(c_total, 128)
    n128 = c128 // 128
    if n128 == 1:
        return 128, c128
    groups = min(max_ct // 128, (n128 + 1) // 2)
    ct = groups * 128
    return ct, _round_up(c128, ct)


def _autocorr_kernel(fwd_ref, inv_ref, q_ref, k_ref, v_ref, o_ref):
    # fwd: (2*Fp, L), inv: (L, 2*Fp) -- VMEM-resident constants (constant index_map).
    # q/k/v/o: (L, ct) lane-dense channel tiles.
    fp2 = fwd_ref.shape[0]
    fp = fp2 // 2
    ct = q_ref.shape[-1]

    # Forward real DFT of q and k fused into ONE MXU dot: (2Fp, L) @ (L, 2*ct).
    qk = jnp.concatenate([q_ref[...], k_ref[...]], axis=-1)
    spec = jnp.dot(fwd_ref[...], qk, preferred_element_type=jnp.float32)

    qc = spec[:fp, :ct]
    kc = spec[:fp, ct:]
    qs = spec[fp:, :ct]
    ks = spec[fp:, ct:]

    # Q * conj(K) with Q = Qc - i*Qs, K = Kc - i*Ks   (VPU elementwise, f32).
    pr = qc * kc + qs * ks
    pi = qc * ks - qs * kc

    # Inverse real DFT (Hermitian weights + 1/L folded into inv), ONE MXU dot:
    # (L, 2Fp) @ (2Fp, ct).
    p = jnp.concatenate([pr, pi], axis=0).astype(inv_ref.dtype)
    corr = jnp.dot(inv_ref[...], p, preferred_element_type=jnp.float32)

    o_ref[...] = (corr + v_ref[...].astype(jnp.float32)).astype(o_ref.dtype)


def autocorrelation_forward(queries, keys, values, attn_mask=None, *,
                            compute_dtype=jnp.float32):
    """Pallas equivalent of AutoCorrelation.forward. Returns (new_x, None)."""
    del attn_mask  # unused by the reference forward
    B, L, D = queries.shape
    out_dtype = queries.dtype
    cd = np.dtype(compute_dtype)

    fwd_np, inv_np = _dft_constants_np(L)
    fwd = jnp.asarray(fwd_np, dtype=cd)
    inv = jnp.asarray(inv_np, dtype=cd)
    fp2 = fwd.shape[0]

    q = queries.astype(cd)
    k = keys.astype(cd)
    v = values

    max_ct = 512 if L < 1024 else 256   # tighter tiles at large L for v7x's 64 MiB VMEM

    def _vmem_limit(ct):
        cb = cd.itemsize
        est = 2 * (fwd.size + inv.size) * cb                                  # constants (x2 buffers)
        est += 2 * L * ct * 2 * cb                                            # q, k blocks (x2 buffers)
        est += 2 * L * ct * (v.dtype.itemsize + np.dtype(out_dtype).itemsize)  # v, out blocks
        est += (2 * L * 2 * ct + 6 * fp2 * ct + L * ct) * 4                   # f32 intermediates
        return int(min(max(2 * est + (4 << 20), 32 << 20), 64 << 20))

    if D % 128 == 0:
        # Direct (B, L, D) layout: no host-side transposes; 2-D (batch, channel) grid.
        cands = [c for c in (512, 384, 256, 128) if c <= max_ct]
        ct = max(c for c in cands if D % c == 0)
        grid = (B, D // ct)
        data_spec = pl.BlockSpec((None, L, ct), lambda b, c: (b, 0, c))
        out, = (pl.pallas_call(
            _autocorr_kernel,
            out_shape=jax.ShapeDtypeStruct((B, L, D), out_dtype),
            grid_spec=pltpu.PrefetchScalarGridSpec(
                num_scalar_prefetch=0,
                grid=grid,
                in_specs=[
                    pl.BlockSpec(fwd.shape, lambda b, c: (0, 0)),
                    pl.BlockSpec(inv.shape, lambda b, c: (0, 0)),
                    data_spec, data_spec, data_spec,
                ],
                out_specs=data_spec,
            ),
            compiler_params=pltpu.CompilerParams(
                dimension_semantics=("parallel", "parallel"),
                vmem_limit_bytes=_vmem_limit(ct)),
        )(fwd, inv, q, k, v),)
        return out, None

    # Packed path: fuse (B, D) into a lane-dense channel axis: (B, L, D) -> (L, B*D).
    c_total = B * D

    def to_ld(x):
        return jnp.transpose(x, (1, 0, 2)).reshape(L, c_total)

    qt, kt, vt = to_ld(q), to_ld(k), to_ld(v)

    ct, c_pad = _pick_tiling(c_total, max_ct)
    if c_pad != c_total:
        pad = ((0, 0), (0, c_pad - c_total))
        qt, kt, vt = jnp.pad(qt, pad), jnp.pad(kt, pad), jnp.pad(vt, pad)
    grid = (c_pad // ct,)

    chan_spec = pl.BlockSpec((L, ct), lambda c: (0, c))
    out_ld = pl.pallas_call(
        _autocorr_kernel,
        out_shape=jax.ShapeDtypeStruct((L, c_pad), out_dtype),
        grid_spec=pltpu.PrefetchScalarGridSpec(
            num_scalar_prefetch=0,
            grid=grid,
            in_specs=[
                pl.BlockSpec(fwd.shape, lambda c: (0, 0)),
                pl.BlockSpec(inv.shape, lambda c: (0, 0)),
                chan_spec, chan_spec, chan_spec,
            ],
            out_specs=chan_spec,
        ),
        compiler_params=pltpu.CompilerParams(
            dimension_semantics=("parallel",),
            vmem_limit_bytes=_vmem_limit(ct)),
    )(fwd, inv, qt, kt, vt)

    new_x = out_ld[:, :c_total].reshape(L, B, D).transpose(1, 0, 2)
    return new_x, None


def _reference(queries, keys, values):
    # Pure-JAX reference mirroring the PyTorch FFT implementation.
    q_fft = jnp.fft.rfft(queries, axis=1)
    k_fft = jnp.fft.rfft(keys, axis=1)
    corr = jnp.fft.irfft(q_fft * jnp.conj(k_fft), n=queries.shape[1], axis=1)
    return corr + values


if __name__ == "__main__":
    key = jax.random.PRNGKey(0)
    kq, kk, kv = jax.random.split(key, 3)

    # --- Test 1: packed (fused-channel) path, exact f32 DFT --------------------------
    B, L, D = 2, 8, 32
    q1 = jax.random.normal(kq, (B, L, D), dtype=jnp.float32)
    k1 = jax.random.normal(kk, (B, L, D), dtype=jnp.float32)
    v1 = jax.random.normal(kv, (B, L, D), dtype=jnp.float32)
    out1, attn = autocorrelation_forward(q1, k1, v1, attn_mask=None)
    out1 = jax.block_until_ready(out1)
    ref1 = _reference(q1, k1, v1)
    assert attn is None
    assert np.allclose(np.asarray(out1), np.asarray(ref1), atol=1e-4, rtol=1e-4)

    # --- Test 2: direct-layout path (D % 128 == 0), 2-D grid, no host transposes -----
    D2 = 128
    q2 = jax.random.normal(kq, (B, L, D2), dtype=jnp.float32)
    k2 = jax.random.normal(kk, (B, L, D2), dtype=jnp.float32)
    v2 = jax.random.normal(kv, (B, L, D2), dtype=jnp.float32)
    out2, _ = autocorrelation_forward(q2, k2, v2, attn_mask=None)
    out2 = jax.block_until_ready(out2)
    ref2 = _reference(q2, k2, v2)
    assert np.allclose(np.asarray(out2), np.asarray(ref2), atol=1e-4, rtol=1e-4)

    # --- Test 3: bf16 MXU feed (fast path on v5e/v6e), f32 accumulation --------------
    out3, _ = autocorrelation_forward(q1, k1, v1, attn_mask=None,
                                      compute_dtype=jnp.bfloat16)
    out3 = jax.block_until_ready(out3)
    diff = np.asarray(out3, dtype=np.float32) - np.asarray(ref1, dtype=np.float32)
    rel = np.linalg.norm(diff) / np.linalg.norm(np.asarray(ref1))
    assert rel < 3e-2, f"bf16 path relative error too large: {rel}"

    print("KERNEL_OK")
</pallas_src>

<mosaic_0001>
module attributes {stable_mosaic.version = 11 : i64} {
  func.func @_autocorr_kernel(%arg0: i32, %arg1: memref<16x8xf32, #tpu.memory_space<vmem>>, %arg2: memref<8x16xf32, #tpu.memory_space<vmem>>, %arg3: memref<8x128xf32, #tpu.memory_space<vmem>>, %arg4: memref<8x128xf32, #tpu.memory_space<vmem>>, %arg5: memref<8x128xf32, #tpu.memory_space<vmem>>, %arg6: memref<8x128xf32, #tpu.memory_space<vmem>>) attributes {dimension_semantics = [#tpu.dimension_semantics<parallel>], iteration_bounds = array<i64: 1>, scalar_prefetch = 0 : i64, scratch_operands = 0 : i64, tpu.core_type = #tpu.core_type<tc>, window_params = [{pipeline_mode = #tpu.pipeline_mode<synchronous>, transform_indices = @transform_0, window_bounds = array<i64: 16, 8>}, {pipeline_mode = #tpu.pipeline_mode<synchronous>, transform_indices = @transform_1, window_bounds = array<i64: 8, 16>}, {transform_indices = @transform_2, window_bounds = array<i64: 8, 128>}, {transform_indices = @transform_3, window_bounds = array<i64: 8, 128>}, {transform_indices = @transform_4, window_bounds = array<i64: 8, 128>}, {transform_indices = @transform_5, window_bounds = array<i64: 8, 128>}]} {
    %c0 = arith.constant 0 : index
    %c0_0 = arith.constant 0 : index
    %0 = vector.load %arg3[%c0, %c0_0] : memref<8x128xf32, #tpu.memory_space<vmem>>, vector<8x128xf32>
    %c0_1 = arith.constant 0 : index
    %c0_2 = arith.constant 0 : index
    %1 = vector.load %arg4[%c0_1, %c0_2] : memref<8x128xf32, #tpu.memory_space<vmem>>, vector<8x128xf32>
    %2 = tpu.concatenate %0, %1 in 1 : vector<8x128xf32>, vector<8x128xf32> -> vector<8x256xf32>
    %c0_3 = arith.constant 0 : index
    %c0_4 = arith.constant 0 : index
    %3 = vector.load %arg1[%c0_3, %c0_4] : memref<16x8xf32, #tpu.memory_space<vmem>>, vector<16x8xf32>
    %cst = arith.constant dense<0.000000e+00> : vector<16x256xf32>
    %4 = tpu.matmul %3, %2, %cst {dimension_numbers = #tpu.dot_dimension_numbers<[1], [0], [0], [1], [0, 0, 1, 1], [], []>} : vector<16x8xf32>, vector<8x256xf32>, vector<16x256xf32> -> vector<16x256xf32>
    %5 = vector.extract_strided_slice %4 {offsets = [0, 0], sizes = [8, 128], strides = [1, 1]} : vector<16x256xf32> to vector<8x128xf32>
    %6 = vector.extract_strided_slice %4 {offsets = [0, 128], sizes = [8, 128], strides = [1, 1]} : vector<16x256xf32> to vector<8x128xf32>
    %7 = vector.extract_strided_slice %4 {offsets = [8, 0], sizes = [8, 128], strides = [1, 1]} : vector<16x256xf32> to vector<8x128xf32>
    %8 = vector.extract_strided_slice %4 {offsets = [8, 128], sizes = [8, 128], strides = [1, 1]} : vector<16x256xf32> to vector<8x128xf32>
    %9 = arith.mulf %5, %6 : vector<8x128xf32>
    %10 = arith.mulf %7, %8 : vector<8x128xf32>
    %11 = arith.addf %9, %10 : vector<8x128xf32>
    %12 = arith.mulf %5, %8 : vector<8x128xf32>
    %13 = arith.mulf %7, %6 : vector<8x128xf32>
    %14 = arith.subf %12, %13 : vector<8x128xf32>
    %15 = tpu.concatenate %11, %14 in 0 : vector<8x128xf32>, vector<8x128xf32> -> vector<16x128xf32>
    %c0_5 = arith.constant 0 : index
    %c0_6 = arith.constant 0 : index
    %16 = vector.load %arg2[%c0_5, %c0_6] : memref<8x16xf32, #tpu.memory_space<vmem>>, vector<8x16xf32>
    %cst_7 = arith.constant dense<0.000000e+00> : vector<8x128xf32>
    %17 = tpu.matmul %16, %15, %cst_7 {dimension_numbers = #tpu.dot_dimension_numbers<[1], [0], [0], [1], [0, 0, 1, 1], [], []>} : vector<8x16xf32>, vector<16x128xf32>, vector<8x128xf32> -> vector<8x128xf32>
    %c0_8 = arith.constant 0 : index
    %c0_9 = arith.constant 0 : index
    %18 = vector.load %arg5[%c0_8, %c0_9] : memref<8x128xf32, #tpu.memory_space<vmem>>, vector<8x128xf32>
    %19 = arith.addf %17, %18 : vector<8x128xf32>
    %c0_10 = arith.constant 0 : index
    %c0_11 = arith.constant 0 : index
    %20 = vector.load %arg6[%c0_10, %c0_11] : memref<8x128xf32, #tpu.memory_space<vmem>>, vector<8x128xf32>
    tpu.vector_store %arg6[%c0_10, %c0_11], %19 {strides = array<i32>} : memref<8x128xf32, #tpu.memory_space<vmem>>, vector<8x128xf32>,
    return
  }
  func.func @transform_0(%arg0: i32) -> (i32, i32) {
    %c0_i32 = arith.constant 0 : i32
    %c0_i32_0 = arith.constant 0 : i32
    %c0_i32_1 = arith.constant 0 : i32
    return %c0_i32, %c0_i32_0 : i32, i32
  }
  func.func @transform_1(%arg0: i32) -> (i32, i32) {
    %c0_i32 = arith.constant 0 : i32
    %c0_i32_0 = arith.constant 0 : i32
    %c0_i32_1 = arith.constant 0 : i32
    return %c0_i32, %c0_i32_0 : i32, i32
  }
  func.func @transform_2(%arg0: i32) -> (i32, i32) {
    %c0_i32 = arith.constant 0 : i32
    %c0_i32_0 = arith.constant 0 : i32
    return %c0_i32, %arg0 : i32, i32
  }
  func.func @transform_3(%arg0: i32) -> (i32, i32) {
    %c0_i32 = arith.constant 0 : i32
    %c0_i32_0 = arith.constant 0 : i32
    return %c0_i32, %arg0 : i32, i32
  }
  func.func @transform_4(%arg0: i32) -> (i32, i32) {
    %c0_i32 = arith.constant 0 : i32
    %c0_i32_0 = arith.constant 0 : i32
    return %c0_i32, %arg0 : i32, i32
  }
  func.func @transform_5(%arg0: i32) -> (i32, i32) {
    %c0_i32 = arith.constant 0 : i32
    %c0_i32_0 = arith.constant 0 : i32
    return %c0_i32, %arg0 : i32, i32
  }
}

</mosaic_0001>

<llo_original>
// kernel: tpu_custom_call.1
$region0: #{tpu_custom_call.1}
  #allocation0 [shape = 'u32[]', space=smem, size = 0x4, offset = 0x4, fixed_abs, tag = 'smem constant byte address 0x4 - core index']
  #allocation1 [shape = 'u32[144,128]{1,0:T(1,128)}', space=vmem, size = 0x12000, scoped, tag = 'internal scratch']
  %s0 = inlined_call_operand.vmem [shape: f32[16,8], index: 0, kind: input, shape index: {}]
  %s1 = inlined_call_operand.vmem [shape: f32[8,16], index: 1, kind: input, shape index: {}]
  %s2 = inlined_call_operand.vmem [shape: f32[8,128], index: 2, kind: input, shape index: {}]
  %s3 = inlined_call_operand.vmem [shape: f32[8,128], index: 3, kind: input, shape index: {}]
  %s4 = inlined_call_operand.hbm [shape: f32[8,128], index: 4, kind: input, shape index: {}]
  %s5 = inlined_call_operand.hbm [shape: f32[8,128], index: 5, kind: output, shape index: {}]
  %s6 = sld [smem:[#allocation0]]
  $region34: #{tpu_custom_call.1} parent=0
    _
  %s8 = ssub.s32 1, %s6
  %s9 = scalar_select 0, %s8, %s6
  $region1: #{tpu_custom_call.1} parent=0
    #allocation2 [shape = 'u8[4096]{0}', space=vmem, size = 0x1000, scoped, tag = 'input window, operand 4, single buffered']
    #allocation3 [shape = 's32[1]{0}', space=sflag, size = 0x4, scoped, tag = 'scoped memory for tpu_custom_call.1']
    #allocation4 [shape = 's32[1]{0}', space=sflag, size = 0x4, scoped, tag = 'scoped memory for tpu_custom_call.1']
    #allocation5 [shape = 'u8[4096]{0}', space=vmem, size = 0x1000, scoped, tag = 'output window, operand 0, single buffered']
    %10 = vsyncpa [#allocation3], 0
    %11 = vsyncpa [#allocation4], 0
    // Predicated region
    $region2: #{tpu_custom_call.1} parent=1 // pred_check
      _
    $region3: #{tpu_custom_call.1} parent=1 // pred_check_branch
      %13 = sbr.rel (0) target = $region5
    $region4: #{tpu_custom_call.1} parent=1 // pred_region
      _
    $region5: #{tpu_custom_call.1} parent=1 // pred_fallthru
      _
    // Predicated region
    $region6: #{tpu_custom_call.1} parent=1 // pred_check
      _
    $region7: #{tpu_custom_call.1} parent=1 // pred_check_branch
      %15 = sbr.rel (0) target = $region9
    $region8: #{tpu_custom_call.1} parent=1 // pred_region
      _
    $region9: #{tpu_custom_call.1} parent=1 // pred_fallthru
      _
    // Predicated region
    $region10: #{tpu_custom_call.1} parent=1 // pred_check
      _
    $region11: #{tpu_custom_call.1} parent=1 // pred_check_branch
      %17 = sbr.rel (0) target = $region13
    $region12: #{tpu_custom_call.1} parent=1 // pred_region
      _
    $region13: #{tpu_custom_call.1} parent=1 // pred_fallthru
      _
    // Predicated region
    $region14: #{tpu_custom_call.1} parent=1 // pred_check
      _
    $region15: #{tpu_custom_call.1} parent=1 // pred_check_branch
      %19 = sbr.rel (0) target = $region17
    $region16: #{tpu_custom_call.1} parent=1 // pred_region
      _
    $region17: #{tpu_custom_call.1} parent=1 // pred_fallthru
      _
    // Predicated region
    $region18: #{tpu_custom_call.1} parent=1 // pred_check
      _
    $region19: #{tpu_custom_call.1} parent=1 // pred_check_branch
      %21 = sbr.rel (0) target = $region21
    $region20: #{tpu_custom_call.1} parent=1 // pred_region
      %s23 = ssub.s32 128, 128
      %24 = vsyncadd [#allocation3], %s23
      %s26 = sshll.u32 [#allocation2], 4
      %s27 = int_to_ptr.vmem [resolvable:$true] %s26
      %29 = dma.hbm_to_vmem [thread:$0]  %s4, 128, %s27, [#allocation3]
    $region21: #{tpu_custom_call.1} parent=1 // pred_fallthru
      _
    // Predicated region
    $region22: #{tpu_custom_call.1} parent=1 // pred_check
      _
    $region23: #{tpu_custom_call.1} parent=1 // pred_check_branch
      %31 = sbr.rel (0) target = $region25
    $region24: #{tpu_custom_call.1} parent=1 // pred_region
      %32 = dma.done [#allocation3], 128
    $region25: #{tpu_custom_call.1} parent=1 // pred_fallthru
      _
    %v33 = vld [vmem:[%s2] sm:$0xff]
    %v34 = vld [vmem:[%s3] sm:$0xff]
    %v35 = vld [vmem:[%s0] sm:$0xff]
    %v36 = vld [vmem:[%s0 + $0x8] sm:$0xff]
    %vm37 = vcmask 64512
    %v39 = vsel %vm37, %v35, 0
    %v42 = vsel %vm37, %v36, 0
    %44 = vmatprep.subr.mxu0 0.0
    %45 = vmatpush1.msra.mxu0 0.0
    %46 = vmatprep.subr.mxu0 0.0
    %47 = vmatpush1.msra.mxu0 0.0
    %48 = vmatprep.subr.mxu0 0.0
    %49 = vmatpush1.msra.mxu0 0.0
    %50 = vmatprep.subr.mxu0 0.0
    %51 = vmatpush1.msra.mxu0 0.0
    %52 = vmatprep.subr.mxu0 0.0
    %53 = vmatpush1.msra.mxu0 0.0
    %54 = vmatprep.subr.mxu0 0.0
    %55 = vmatpush1.msra.mxu0 0.0
    %56 = vmatprep.subr.mxu0 0.0
    %57 = vmatpush1.msra.mxu0 0.0
    %58 = vmatprep.subr.mxu0 0.0
    %59 = vmatpush1.msra.mxu0 0.0
    %60 = vmatprep.subr.mxu0 0.0
    %61 = vmatpush1.msra.mxu0 0.0
    %62 = vmatprep.subr.mxu0 0.0
    %63 = vmatpush1.msra.mxu0 0.0
    %64 = vmatprep.subr.mxu0 0.0
    %65 = vmatpush1.msra.mxu0 0.0
    %66 = vmatprep.subr.mxu0 0.0
    %67 = vmatpush1.msra.mxu0 0.0
    %68 = vmatprep.subr.mxu0 0.0
    %69 = vmatpush1.msra.mxu0 0.0
    %70 = vmatprep.subr.mxu0 0.0
    %71 = vmatpush1.msra.mxu0 0.0
    %72 = vmatprep.subr.mxu0 0.0
    %73 = vmatpush1.msra.mxu0 0.0
    %74 = vmatprep.subr.mxu0 %v34
    %75 = vmatpush1.msra.mxu0 %v33
    %76 = vmatprep.subr.mxu0 0.0
    %77 = vmatpush2.msra.mxu0 0.0
    %78 = vmatprep.subr.mxu0 0.0
    %79 = vmatpush2.msra.mxu0 0.0
    %80 = vmatprep.subr.mxu0 0.0
    %81 = vmatpush2.msra.mxu0 0.0
    %82 = vmatprep.subr.mxu0 0.0
    %83 = vmatpush2.msra.mxu0 0.0
    %84 = vmatprep.subr.mxu0 0.0
    %85 = vmatpush2.msra.mxu0 0.0
    %86 = vmatprep.subr.mxu0 0.0
    %87 = vmatpush2.msra.mxu0 0.0
    %88 = vmatprep.subr.mxu0 0.0
    %89 = vmatpush2.msra.mxu0 0.0
    %90 = vmatprep.subr.mxu0 0.0
    %91 = vmatpush2.msra.mxu0 0.0
    %92 = vmatprep.subr.mxu0 0.0
    %93 = vmatpush2.msra.mxu0 0.0
    %94 = vmatprep.subr.mxu0 0.0
    %95 = vmatpush2.msra.mxu0 0.0
    %96 = vmatprep.subr.mxu0 0.0
    %97 = vmatpush2.msra.mxu0 0.0
    %98 = vmatprep.subr.mxu0 0.0
    %99 = vmatpush2.msra.mxu0 0.0
    %100 = vmatprep.subr.mxu0 0.0
    %101 = vmatpush2.msra.mxu0 0.0
    %102 = vmatprep.subr.mxu0 0.0
    %103 = vmatpush2.msra.mxu0 0.0
    %104 = vmatprep.subr.mxu0 0.0
    %105 = vmatpush2.msra.mxu0 0.0
    %106 = vmatprep.subr.mxu0 0.0
    %107 = vmatpush2.msra.mxu0 0.0
    %108 = vmatprep.mubr.f32.mxu0 0.0
    %109 = vmatmul.mubr.f32.gmra.mxu0 %v39
    %v110 = vpop.f32.mrf.mxu0
    %v111 = vadd.f32 0.0, %v110
    %v112 = vpop.f32.mrf.mxu0
    %v113 = vadd.f32 0.0, %v112
    %114 = vmatprep.mubr.f32.mxu0 0.0
    %115 = vmatmul.mubr.f32.gmra.mxu0 %v42
    %v116 = vpop.f32.mrf.mxu0
    %v117 = vadd.f32 0.0, %v116
    %v118 = vpop.f32.mrf.mxu0
    %v119 = vadd.f32 0.0, %v118
    %120 = vdwg.mxu0
    %v121 = vmul.f32 %v111, %v113
    %v122 = vmul.f32 %v117, %v119
    %v123 = vadd.f32 %v121, %v122
    %v124 = vmul.f32 %v111, %v119
    %v125 = vmul.f32 %v117, %v113
    %v126 = vsub.f32 %v124, %v125
    %v127 = vld [vmem:[%s1] sm:$0xff]
    %v128 = vld [vmem:[#allocation2] sm:$0xff]
    %vm129 = vcmask 130048
    %v131 = vsel %vm129, %v127, 0
    %133 = vmatprep.subr.mxu0 0.0
    %134 = vmatpush1.msra.mxu0 0.0
    %135 = vmatprep.subr.mxu0 0.0
    %136 = vmatpush1.msra.mxu0 0.0
    %137 = vmatprep.subr.mxu0 0.0
    %138 = vmatpush1.msra.mxu0 0.0
    %139 = vmatprep.subr.mxu0 0.0
    %140 = vmatpush1.msra.mxu0 0.0
    %141 = vmatprep.subr.mxu0 0.0
    %142 = vmatpush1.msra.mxu0 0.0
    %143 = vmatprep.subr.mxu0 0.0
    %144 = vmatpush1.msra.mxu0 0.0
    %145 = vmatprep.subr.mxu0 0.0
    %146 = vmatpush1.msra.mxu0 0.0
    %147 = vmatprep.subr.mxu0 0.0
    %148 = vmatpush1.msra.mxu0 0.0
    %149 = vmatprep.subr.mxu0 0.0
    %150 = vmatpush1.msra.mxu0 0.0
    %151 = vmatprep.subr.mxu0 0.0
    %152 = vmatpush1.msra.mxu0 0.0
    %153 = vmatprep.subr.mxu0 0.0
    %154 = vmatpush1.msra.mxu0 0.0
    %155 = vmatprep.subr.mxu0 0.0
    %156 = vmatpush1.msra.mxu0 0.0
    %157 = vmatprep.subr.mxu0 0.0
    %158 = vmatpush1.msra.mxu0 0.0
    %159 = vmatprep.subr.mxu0 0.0
    %160 = vmatpush1.msra.mxu0 0.0
    %161 = vmatprep.subr.mxu0 0.0
    %162 = vmatpush1.msra.mxu0 %v126
    %163 = vmatprep.subr.mxu0 0.0
    %164 = vmatpush1.msra.mxu0 %v123
    %165 = vmatprep.subr.mxu0 0.0
    %166 = vmatpush2.msra.mxu0 0.0
    %167 = vmatprep.subr.mxu0 0.0
    %168 = vmatpush2.msra.mxu0 0.0
    %169 = vmatprep.subr.mxu0 0.0
    %170 = vmatpush2.msra.mxu0 0.0
    %171 = vmatprep.subr.mxu0 0.0
    %172 = vmatpush2.msra.mxu0 0.0
    %173 = vmatprep.subr.mxu0 0.0
    %174 = vmatpush2.msra.mxu0 0.0
    %175 = vmatprep.subr.mxu0 0.0
    %176 = vmatpush2.msra.mxu0 0.0
    %177 = vmatprep.subr.mxu0 0.0
    %178 = vmatpush2.msra.mxu0 0.0
    %179 = vmatprep.subr.mxu0 0.0
    %180 = vmatpush2.msra.mxu0 0.0
    %181 = vmatprep.subr.mxu0 0.0
    %182 = vmatpush2.msra.mxu0 0.0
    %183 = vmatprep.subr.mxu0 0.0
    %184 = vmatpush2.msra.mxu0 0.0
    %185 = vmatprep.subr.mxu0 0.0
    %186 = vmatpush2.msra.mxu0 0.0
    %187 = vmatprep.subr.mxu0 0.0
    %188 = vmatpush2.msra.mxu0 0.0
    %189 = vmatprep.subr.mxu0 0.0
    %190 = vmatpush2.msra.mxu0 0.0
    %191 = vmatprep.subr.mxu0 0.0
    %192 = vmatpush2.msra.mxu0 0.0
    %193 = vmatprep.subr.mxu0 0.0
    %194 = vmatpush2.msra.mxu0 0.0
    %195 = vmatprep.subr.mxu0 0.0
    %196 = vmatpush2.msra.mxu0 0.0
    %197 = vmatprep.mubr.f32.mxu0 0.0
    %198 = vmatmul.mubr.f32.gmra.mxu0 %v131
    %v199 = vpop.f32.mrf.mxu0
    %v200 = vadd.f32 %v128, %v199
    %v201 = vpop.f32.mrf.mxu0
    %202 = vdwg.mxu0
    %203 = vst [vmem:[#allocation5] sm:$0xff] %v200
    // Predicated region
    $region26: #{tpu_custom_call.1} parent=1 // pred_check
      _
    $region27: #{tpu_custom_call.1} parent=1 // pred_check_branch
      %205 = sbr.rel (0) target = $region29
    $region28: #{tpu_custom_call.1} parent=1 // pred_region
      %s207 = ssub.s32 128, 128
      %208 = vsyncadd [#allocation4], %s207
      %s210 = sshll.u32 [#allocation5], 4
      %s211 = int_to_ptr.vmem [resolvable:$true] %s210
      %213 = dma.vmem_to_hbm [thread:$0]  %s211, 128, %s5, [#allocation4]
    $region29: #{tpu_custom_call.1} parent=1 // pred_fallthru
      _
    // Predicated region
    $region30: #{tpu_custom_call.1} parent=1 // pred_check
      _
    $region31: #{tpu_custom_call.1} parent=1 // pred_check_branch
      %215 = sbr.rel (0) target = $region33
    $region32: #{tpu_custom_call.1} parent=1 // pred_region
      %216 = dma.done [#allocation4], 128
    $region33: #{tpu_custom_call.1} parent=1 // pred_fallthru
      _
    %217 = vsyncpa [#allocation3], 1
    %218 = vsyncpa [#allocation4], 1

</llo_original>
